<compile_context>
chip_gen: v6e
topology: v6e:2x2x1
jax: 0.10.0
libtpu: 0.0.40
codegen_flags: <defaults>
</compile_context>

<pallas_src>
import jax
import jax.numpy as jnp
from jax.experimental import pallas as pl
from jax.experimental.pallas import tpu as pltpu

# Fixed (non-trainable) 3x3 weights from the module's __init__ (reference only).
KERNEL_X = ((-3.0, 0.0, 3.0), (-10.0, 0.0, 10.0), (-3.0, 0.0, 3.0))
KERNEL_Y = ((-3.0, -10.0, -3.0), (0.0, 0.0, 0.0), (3.0, 10.0, 3.0))


def _vmem_limit_bytes():
    try:
        cap = int(pltpu.get_tpu_info().vmem_capacity_bytes)
    except Exception:
        cap = 64 * 1024 * 1024          # conservative fallback (v7x per-core)
    return max(32 * 1024 * 1024, min(3 * cap // 4, 112 * 1024 * 1024))


def _pick_strip(H, W, C, in_bytes, budget):
    """Largest row-strip TH dividing H whose working set fits in `budget`."""
    cands = [H] + [t for t in (1024, 512, 256, 128, 64, 32, 16, 8)
                   if t < H and H % t == 0]

    def footprint(th):
        in_buf = 2 * C * th * W * in_bytes          # double-buffered strip
        halo_buf = 4 * C * 8 * W * in_bytes         # 2 halos, double-buffered
        out_buf = 2 * th * W * 4                    # double-buffered output
        temps = 6 * th * W * 4                      # live stencil temporaries
        return in_buf + halo_buf + out_buf + temps

    for th in cands:
        if footprint(th) <= budget:
            return th
    return cands[-1]


def _channel_sum_f32(ref):
    """Unrolled sum over the (static, small) channel axis of a (C, R, W) ref."""
    acc = ref[0].astype(jnp.float32)
    for c in range(1, ref.shape[0]):
        acc = acc + ref[c].astype(jnp.float32)
    return acc


def _hpass(s, W):
    """Horizontal pass of the separable stencil with a zero column halo.

    Returns (h_diff, h_smooth):
      h_diff(i,j)   = s(i,j+1) - s(i,j-1)                 -> edge_x after vertical [3,10,3]
      h_smooth(i,j) = 3*s(i,j-1) + 10*s(i,j) + 3*s(i,j+1) -> edge_y after vertical diff
    """
    col = jax.lax.broadcasted_iota(jnp.int32, s.shape, 1)
    left = jnp.where(col == 0, 0.0, pltpu.roll(s, shift=1, axis=1))
    right = jnp.where(col == W - 1, 0.0, pltpu.roll(s, shift=W - 1, axis=1))
    return right - left, 3.0 * left + 10.0 * s + 3.0 * right


def _sobel_kernel(x_ref, top_ref, bot_ref, o_ref):
    # x_ref:   (C, TH, W)  row strip of the input        (batch dim squeezed)
    # top_ref: (C, HB, W)  rows just above the strip     (last row is the halo)
    # bot_ref: (C, HB, W)  rows just below the strip     (first row is the halo)
    # o_ref:   (TH, W)     output strip (batch & channel dims squeezed), f32
    TH, W = o_ref.shape
    HB = top_ref.shape[1]
    i = pl.program_id(1)
    last = pl.num_programs(1) - 1

    # Channel sum + horizontal pass for the strip.
    hd, hs = _hpass(_channel_sum_f32(x_ref), W)            # (TH, W) each

    # Halo rows: same channel sum + horizontal pass, then zeroed at the image
    # border (== conv2d zero padding).  Their BlockSpec indices are clamped at
    # the borders, so there they hold in-range (but unused) data masked here.
    hd_t, hs_t = _hpass(_channel_sum_f32(top_ref), W)      # (HB, W)
    hd_b, hs_b = _hpass(_channel_sum_f32(bot_ref), W)
    hd_top = jnp.where(i == 0, 0.0, hd_t[HB - 1:HB, :])    # (1, W)
    hs_top = jnp.where(i == 0, 0.0, hs_t[HB - 1:HB, :])
    hd_bot = jnp.where(i == last, 0.0, hd_b[0:1, :])
    hs_bot = jnp.where(i == last, 0.0, hs_b[0:1, :])

    row = jax.lax.broadcasted_iota(jnp.int32, (TH, W), 0)

    # edge_x = vertical [3,10,3] smoothing of the horizontal diff.
    up = jnp.where(row == 0, hd_top, pltpu.roll(hd, shift=1, axis=0))
    dn = jnp.where(row == TH - 1, hd_bot, pltpu.roll(hd, shift=TH - 1, axis=0))
    z = jnp.abs(3.0 * up + 10.0 * hd + 3.0 * dn)

    # edge_y = vertical [-1,0,1] diff of the horizontal smooth.
    up = jnp.where(row == 0, hs_top, pltpu.roll(hs, shift=1, axis=0))
    dn = jnp.where(row == TH - 1, hs_bot, pltpu.roll(hs, shift=TH - 1, axis=0))
    z = z + jnp.abs(dn - up)

    o_ref[...] = jnp.tanh(z).astype(o_ref.dtype)


def sobel(pred):
    """pred: (N, C, H, W), any float dtype -> tanh(|edge_x|+|edge_y|): (N,1,H,W) f32."""
    N, C, H, W = pred.shape
    in_bytes = jnp.dtype(pred.dtype).itemsize

    vmem_limit = _vmem_limit_bytes()
    TH = _pick_strip(H, W, C, in_bytes, budget=(vmem_limit * 3) // 5)
    num_strips = H // TH
    HB = 8 if (H >= 8 and H % 8 == 0) else H   # halo block rows (sublane-aligned)
    bstride = TH // HB                          # halo blocks per strip
    nhb = H // HB                               # halo blocks along H

    x_spec = pl.BlockSpec((pl.Squeezed(), C, TH, W), lambda n, i: (n, 0, i, 0))
    top_spec = pl.BlockSpec(
        (pl.Squeezed(), C, HB, W),
        lambda n, i: (n, 0, jnp.maximum(i * bstride - 1, 0), 0))
    bot_spec = pl.BlockSpec(
        (pl.Squeezed(), C, HB, W),
        lambda n, i: (n, 0, jnp.minimum((i + 1) * bstride, nhb - 1), 0))
    # TODO(synk): for production W < 128 the output last dim is lane-sparse
    # (masked vst); a wrapper-side layout presenting a >=128 last dim would help.
    out_spec = pl.BlockSpec((pl.Squeezed(), pl.Squeezed(), TH, W),
                            lambda n, i: (n, 0, i, 0))

    return pl.pallas_call(
        _sobel_kernel,
        out_shape=jax.ShapeDtypeStruct((N, 1, H, W), jnp.float32),
        grid_spec=pltpu.PrefetchScalarGridSpec(
            num_scalar_prefetch=0,
            grid=(N, num_strips),               # strips independent -> both parallel
            in_specs=[x_spec, top_spec, bot_spec],
            out_specs=out_spec,
        ),
        compiler_params=pltpu.CompilerParams(
            dimension_semantics=("parallel", "parallel"),
            vmem_limit_bytes=vmem_limit,
        ),
    )(pred, pred, pred)                         # same HBM buffer, three windows


def _reference(pred):
    # Pure-JAX reference replicating F.conv2d with the expanded weights.
    C = pred.shape[1]
    kx = jnp.asarray(KERNEL_X, jnp.float32)
    ky = jnp.asarray(KERNEL_Y, jnp.float32)
    wx = jnp.broadcast_to(kx, (1, C, 3, 3))
    wy = jnp.broadcast_to(ky, (1, C, 3, 3))
    dn = ("NCHW", "OIHW", "NCHW")
    ex = jax.lax.conv_general_dilated(pred.astype(jnp.float32), wx, (1, 1),
                                      ((1, 1), (1, 1)), dimension_numbers=dn,
                                      precision=jax.lax.Precision.HIGHEST)
    ey = jax.lax.conv_general_dilated(pred.astype(jnp.float32), wy, (1, 1),
                                      ((1, 1), (1, 1)), dimension_numbers=dn,
                                      precision=jax.lax.Precision.HIGHEST)
    return jnp.tanh(jnp.abs(ex) + jnp.abs(ey))


if __name__ == "__main__":
    key = jax.random.PRNGKey(0)
    N, C, H, W = 2, 4, 16, 16
    x = jax.random.normal(key, (N, C, H, W), dtype=jnp.float32)

    out = sobel(x)
    jax.block_until_ready(out)

    ref = _reference(x)
    assert out.shape == (N, 1, H, W)
    err = float(jnp.max(jnp.abs(out - ref)))
    assert err < 1e-4, err

    print("KERNEL_OK")
</pallas_src>

<mosaic_0001>
module attributes {stable_mosaic.version = 11 : i64} {
  func.func @_sobel_kernel(%arg0: i32, %arg1: i32, %arg2: memref<1x4x16x16xf32, #tpu.memory_space<vmem>>, %arg3: memref<1x4x8x16xf32, #tpu.memory_space<vmem>>, %arg4: memref<1x4x8x16xf32, #tpu.memory_space<vmem>>, %arg5: memref<1x1x16x16xf32, #tpu.memory_space<vmem>>) attributes {dimension_semantics = [#tpu.dimension_semantics<parallel>, #tpu.dimension_semantics<parallel>], iteration_bounds = array<i64: 2, 1>, scalar_prefetch = 0 : i64, scratch_operands = 0 : i64, tpu.core_type = #tpu.core_type<tc>, window_params = [{transform_indices = @transform_0, window_bounds = array<i64: 1, 4, 16, 16>}, {transform_indices = @transform_1, window_bounds = array<i64: 1, 4, 8, 16>}, {transform_indices = @transform_2, window_bounds = array<i64: 1, 4, 8, 16>}, {transform_indices = @transform_3, window_bounds = array<i64: 1, 1, 16, 16>}]} {
    %c0 = arith.constant 0 : index
    %c0_0 = arith.constant 0 : index
    %c0_1 = arith.constant 0 : index
    %c0_2 = arith.constant 0 : index
    %0 = vector.load %arg2[%c0, %c0_0, %c0_1, %c0_2] : memref<1x4x16x16xf32, #tpu.memory_space<vmem>>, vector<1x1x16x16xf32>
    %1 = vector.shape_cast %0 : vector<1x1x16x16xf32> to vector<16x16xf32>
    %c0_3 = arith.constant 0 : index
    %c1 = arith.constant 1 : index
    %c0_4 = arith.constant 0 : index
    %c0_5 = arith.constant 0 : index
    %2 = vector.load %arg2[%c0_3, %c1, %c0_4, %c0_5] : memref<1x4x16x16xf32, #tpu.memory_space<vmem>>, vector<1x1x16x16xf32>
    %3 = vector.shape_cast %2 : vector<1x1x16x16xf32> to vector<16x16xf32>
    %4 = arith.addf %1, %3 : vector<16x16xf32>
    %c0_6 = arith.constant 0 : index
    %c2 = arith.constant 2 : index
    %c0_7 = arith.constant 0 : index
    %c0_8 = arith.constant 0 : index
    %5 = vector.load %arg2[%c0_6, %c2, %c0_7, %c0_8] : memref<1x4x16x16xf32, #tpu.memory_space<vmem>>, vector<1x1x16x16xf32>
    %6 = vector.shape_cast %5 : vector<1x1x16x16xf32> to vector<16x16xf32>
    %7 = arith.addf %4, %6 : vector<16x16xf32>
    %c0_9 = arith.constant 0 : index
    %c3 = arith.constant 3 : index
    %c0_10 = arith.constant 0 : index
    %c0_11 = arith.constant 0 : index
    %8 = vector.load %arg2[%c0_9, %c3, %c0_10, %c0_11] : memref<1x4x16x16xf32, #tpu.memory_space<vmem>>, vector<1x1x16x16xf32>
    %9 = vector.shape_cast %8 : vector<1x1x16x16xf32> to vector<16x16xf32>
    %10 = arith.addf %7, %9 : vector<16x16xf32>
    %11 = tpu.iota {dimensions = array<i32: 1>} : vector<16x16xi32>
    %c0_i32 = arith.constant 0 : i32
    %12 = vector.broadcast %c0_i32 : i32 to vector<16x16xi32>
    %13 = arith.cmpi eq, %11, %12 : vector<16x16xi32>
    %c1_i32 = arith.constant 1 : i32
    %14 = tpu.dynamic_rotate %10 by %c1_i32 dim 1 : vector<16x16xf32>, i32 -> vector<16x16xf32>
    %cst = arith.constant 0.000000e+00 : f32
    %15 = vector.broadcast %cst : f32 to vector<16x16xf32>
    %16 = arith.select %13, %15, %14 : vector<16x16xi1>, vector<16x16xf32>
    %c15_i32 = arith.constant 15 : i32
    %17 = vector.broadcast %c15_i32 : i32 to vector<16x16xi32>
    %18 = arith.cmpi eq, %11, %17 : vector<16x16xi32>
    %c15_i32_12 = arith.constant 15 : i32
    %19 = tpu.dynamic_rotate %10 by %c15_i32_12 dim 1 : vector<16x16xf32>, i32 -> vector<16x16xf32>
    %cst_13 = arith.constant 0.000000e+00 : f32
    %20 = vector.broadcast %cst_13 : f32 to vector<16x16xf32>
    %21 = arith.select %18, %20, %19 : vector<16x16xi1>, vector<16x16xf32>
    %22 = arith.subf %21, %16 : vector<16x16xf32>
    %cst_14 = arith.constant 3.000000e+00 : f32
    %23 = vector.broadcast %cst_14 : f32 to vector<16x16xf32>
    %24 = arith.mulf %23, %16 : vector<16x16xf32>
    %cst_15 = arith.constant 1.000000e+01 : f32
    %25 = vector.broadcast %cst_15 : f32 to vector<16x16xf32>
    %26 = arith.mulf %25, %10 : vector<16x16xf32>
    %27 = arith.addf %24, %26 : vector<16x16xf32>
    %cst_16 = arith.constant 3.000000e+00 : f32
    %28 = vector.broadcast %cst_16 : f32 to vector<16x16xf32>
    %29 = arith.mulf %28, %21 : vector<16x16xf32>
    %30 = arith.addf %27, %29 : vector<16x16xf32>
    %c0_17 = arith.constant 0 : index
    %c0_18 = arith.constant 0 : index
    %c0_19 = arith.constant 0 : index
    %c0_20 = arith.constant 0 : index
    %31 = vector.load %arg3[%c0_17, %c0_18, %c0_19, %c0_20] : memref<1x4x8x16xf32, #tpu.memory_space<vmem>>, vector<1x1x8x16xf32>
    %32 = vector.shape_cast %31 : vector<1x1x8x16xf32> to vector<8x16xf32>
    %c0_21 = arith.constant 0 : index
    %c1_22 = arith.constant 1 : index
    %c0_23 = arith.constant 0 : index
    %c0_24 = arith.constant 0 : index
    %33 = vector.load %arg3[%c0_21, %c1_22, %c0_23, %c0_24] : memref<1x4x8x16xf32, #tpu.memory_space<vmem>>, vector<1x1x8x16xf32>
    %34 = vector.shape_cast %33 : vector<1x1x8x16xf32> to vector<8x16xf32>
    %35 = arith.addf %32, %34 : vector<8x16xf32>
    %c0_25 = arith.constant 0 : index
    %c2_26 = arith.constant 2 : index
    %c0_27 = arith.constant 0 : index
    %c0_28 = arith.constant 0 : index
    %36 = vector.load %arg3[%c0_25, %c2_26, %c0_27, %c0_28] : memref<1x4x8x16xf32, #tpu.memory_space<vmem>>, vector<1x1x8x16xf32>
    %37 = vector.shape_cast %36 : vector<1x1x8x16xf32> to vector<8x16xf32>
    %38 = arith.addf %35, %37 : vector<8x16xf32>
    %c0_29 = arith.constant 0 : index
    %c3_30 = arith.constant 3 : index
    %c0_31 = arith.constant 0 : index
    %c0_32 = arith.constant 0 : index
    %39 = vector.load %arg3[%c0_29, %c3_30, %c0_31, %c0_32] : memref<1x4x8x16xf32, #tpu.memory_space<vmem>>, vector<1x1x8x16xf32>
    %40 = vector.shape_cast %39 : vector<1x1x8x16xf32> to vector<8x16xf32>
    %41 = arith.addf %38, %40 : vector<8x16xf32>
    %42 = tpu.iota {dimensions = array<i32: 1>} : vector<8x16xi32>
    %c0_i32_33 = arith.constant 0 : i32
    %43 = vector.broadcast %c0_i32_33 : i32 to vector<8x16xi32>
    %44 = arith.cmpi eq, %42, %43 : vector<8x16xi32>
    %c1_i32_34 = arith.constant 1 : i32
    %45 = tpu.dynamic_rotate %41 by %c1_i32_34 dim 1 : vector<8x16xf32>, i32 -> vector<8x16xf32>
    %cst_35 = arith.constant 0.000000e+00 : f32
    %46 = vector.broadcast %cst_35 : f32 to vector<8x16xf32>
    %47 = arith.select %44, %46, %45 : vector<8x16xi1>, vector<8x16xf32>
    %c15_i32_36 = arith.constant 15 : i32
    %48 = vector.broadcast %c15_i32_36 : i32 to vector<8x16xi32>
    %49 = arith.cmpi eq, %42, %48 : vector<8x16xi32>
    %c15_i32_37 = arith.constant 15 : i32
    %50 = tpu.dynamic_rotate %41 by %c15_i32_37 dim 1 : vector<8x16xf32>, i32 -> vector<8x16xf32>
    %cst_38 = arith.constant 0.000000e+00 : f32
    %51 = vector.broadcast %cst_38 : f32 to vector<8x16xf32>
    %52 = arith.select %49, %51, %50 : vector<8x16xi1>, vector<8x16xf32>
    %53 = arith.subf %52, %47 : vector<8x16xf32>
    %cst_39 = arith.constant 3.000000e+00 : f32
    %54 = vector.broadcast %cst_39 : f32 to vector<8x16xf32>
    %55 = arith.mulf %54, %47 : vector<8x16xf32>
    %cst_40 = arith.constant 1.000000e+01 : f32
    %56 = vector.broadcast %cst_40 : f32 to vector<8x16xf32>
    %57 = arith.mulf %56, %41 : vector<8x16xf32>
    %58 = arith.addf %55, %57 : vector<8x16xf32>
    %cst_41 = arith.constant 3.000000e+00 : f32
    %59 = vector.broadcast %cst_41 : f32 to vector<8x16xf32>
    %60 = arith.mulf %59, %52 : vector<8x16xf32>
    %61 = arith.addf %58, %60 : vector<8x16xf32>
    %c0_42 = arith.constant 0 : index
    %c0_43 = arith.constant 0 : index
    %c0_44 = arith.constant 0 : index
    %c0_45 = arith.constant 0 : index
    %62 = vector.load %arg4[%c0_42, %c0_43, %c0_44, %c0_45] : memref<1x4x8x16xf32, #tpu.memory_space<vmem>>, vector<1x1x8x16xf32>
    %63 = vector.shape_cast %62 : vector<1x1x8x16xf32> to vector<8x16xf32>
    %c0_46 = arith.constant 0 : index
    %c1_47 = arith.constant 1 : index
    %c0_48 = arith.constant 0 : index
    %c0_49 = arith.constant 0 : index
    %64 = vector.load %arg4[%c0_46, %c1_47, %c0_48, %c0_49] : memref<1x4x8x16xf32, #tpu.memory_space<vmem>>, vector<1x1x8x16xf32>
    %65 = vector.shape_cast %64 : vector<1x1x8x16xf32> to vector<8x16xf32>
    %66 = arith.addf %63, %65 : vector<8x16xf32>
    %c0_50 = arith.constant 0 : index
    %c2_51 = arith.constant 2 : index
    %c0_52 = arith.constant 0 : index
    %c0_53 = arith.constant 0 : index
    %67 = vector.load %arg4[%c0_50, %c2_51, %c0_52, %c0_53] : memref<1x4x8x16xf32, #tpu.memory_space<vmem>>, vector<1x1x8x16xf32>
    %68 = vector.shape_cast %67 : vector<1x1x8x16xf32> to vector<8x16xf32>
    %69 = arith.addf %66, %68 : vector<8x16xf32>
    %c0_54 = arith.constant 0 : index
    %c3_55 = arith.constant 3 : index
    %c0_56 = arith.constant 0 : index
    %c0_57 = arith.constant 0 : index
    %70 = vector.load %arg4[%c0_54, %c3_55, %c0_56, %c0_57] : memref<1x4x8x16xf32, #tpu.memory_space<vmem>>, vector<1x1x8x16xf32>
    %71 = vector.shape_cast %70 : vector<1x1x8x16xf32> to vector<8x16xf32>
    %72 = arith.addf %69, %71 : vector<8x16xf32>
    %73 = tpu.iota {dimensions = array<i32: 1>} : vector<8x16xi32>
    %c0_i32_58 = arith.constant 0 : i32
    %74 = vector.broadcast %c0_i32_58 : i32 to vector<8x16xi32>
    %75 = arith.cmpi eq, %73, %74 : vector<8x16xi32>
    %c1_i32_59 = arith.constant 1 : i32
    %76 = tpu.dynamic_rotate %72 by %c1_i32_59 dim 1 : vector<8x16xf32>, i32 -> vector<8x16xf32>
    %cst_60 = arith.constant 0.000000e+00 : f32
    %77 = vector.broadcast %cst_60 : f32 to vector<8x16xf32>
    %78 = arith.select %75, %77, %76 : vector<8x16xi1>, vector<8x16xf32>
    %c15_i32_61 = arith.constant 15 : i32
    %79 = vector.broadcast %c15_i32_61 : i32 to vector<8x16xi32>
    %80 = arith.cmpi eq, %73, %79 : vector<8x16xi32>
    %c15_i32_62 = arith.constant 15 : i32
    %81 = tpu.dynamic_rotate %72 by %c15_i32_62 dim 1 : vector<8x16xf32>, i32 -> vector<8x16xf32>
    %cst_63 = arith.constant 0.000000e+00 : f32
    %82 = vector.broadcast %cst_63 : f32 to vector<8x16xf32>
    %83 = arith.select %80, %82, %81 : vector<8x16xi1>, vector<8x16xf32>
    %84 = arith.subf %83, %78 : vector<8x16xf32>
    %cst_64 = arith.constant 3.000000e+00 : f32
    %85 = vector.broadcast %cst_64 : f32 to vector<8x16xf32>
    %86 = arith.mulf %85, %78 : vector<8x16xf32>
    %cst_65 = arith.constant 1.000000e+01 : f32
    %87 = vector.broadcast %cst_65 : f32 to vector<8x16xf32>
    %88 = arith.mulf %87, %72 : vector<8x16xf32>
    %89 = arith.addf %86, %88 : vector<8x16xf32>
    %cst_66 = arith.constant 3.000000e+00 : f32
    %90 = vector.broadcast %cst_66 : f32 to vector<8x16xf32>
    %91 = arith.mulf %90, %83 : vector<8x16xf32>
    %92 = arith.addf %89, %91 : vector<8x16xf32>
    %c0_i32_67 = arith.constant 0 : i32
    %93 = arith.cmpi eq, %arg1, %c0_i32_67 : i32
    %94 = vector.extract_strided_slice %53 {offsets = [7, 0], sizes = [1, 16], strides = [1, 1]} : vector<8x16xf32> to vector<1x16xf32>
    %cst_68 = arith.constant 0.000000e+00 : f32
    %95 = vector.broadcast %cst_68 : f32 to vector<1x16xf32>
    %96 = arith.select %93, %95, %94 : vector<1x16xf32>
    %c0_i32_69 = arith.constant 0 : i32
    %97 = arith.cmpi eq, %arg1, %c0_i32_69 : i32
    %98 = vector.extract_strided_slice %61 {offsets = [7, 0], sizes = [1, 16], strides = [1, 1]} : vector<8x16xf32> to vector<1x16xf32>
    %cst_70 = arith.constant 0.000000e+00 : f32
    %99 = vector.broadcast %cst_70 : f32 to vector<1x16xf32>
    %100 = arith.select %97, %99, %98 : vector<1x16xf32>
    %c0_i32_71 = arith.constant 0 : i32
    %101 = arith.cmpi eq, %arg1, %c0_i32_71 : i32
    %102 = vector.extract_strided_slice %84 {offsets = [0, 0], sizes = [1, 16], strides = [1, 1]} : vector<8x16xf32> to vector<1x16xf32>
    %cst_72 = arith.constant 0.000000e+00 : f32
    %103 = vector.broadcast %cst_72 : f32 to vector<1x16xf32>
    %104 = arith.select %101, %103, %102 : vector<1x16xf32>
    %c0_i32_73 = arith.constant 0 : i32
    %105 = arith.cmpi eq, %arg1, %c0_i32_73 : i32
    %106 = vector.extract_strided_slice %92 {offsets = [0, 0], sizes = [1, 16], strides = [1, 1]} : vector<8x16xf32> to vector<1x16xf32>
    %cst_74 = arith.constant 0.000000e+00 : f32
    %107 = vector.broadcast %cst_74 : f32 to vector<1x16xf32>
    %108 = arith.select %105, %107, %106 : vector<1x16xf32>
    %109 = tpu.iota {dimensions = array<i32: 0>} : vector<16x16xi32>
    %c0_i32_75 = arith.constant 0 : i32
    %110 = vector.broadcast %c0_i32_75 : i32 to vector<16x16xi32>
    %111 = arith.cmpi eq, %109, %110 : vector<16x16xi32>
    %c1_i32_76 = arith.constant 1 : i32
    %112 = tpu.dynamic_rotate %22 by %c1_i32_76 dim 0 : vector<16x16xf32>, i32 -> vector<16x16xf32>
    %113 = vector.shape_cast %96 : vector<1x16xf32> to vector<1x16xf32>
    %114 = vector.broadcast %113 : vector<1x16xf32> to vector<16x16xf32>
    %115 = arith.select %111, %114, %112 : vector<16x16xi1>, vector<16x16xf32>
    %c15_i32_77 = arith.constant 15 : i32
    %116 = vector.broadcast %c15_i32_77 : i32 to vector<16x16xi32>
    %117 = arith.cmpi eq, %109, %116 : vector<16x16xi32>
    %c15_i32_78 = arith.constant 15 : i32
    %118 = tpu.dynamic_rotate %22 by %c15_i32_78 dim 0 : vector<16x16xf32>, i32 -> vector<16x16xf32>
    %119 = vector.shape_cast %104 : vector<1x16xf32> to vector<1x16xf32>
    %120 = vector.broadcast %119 : vector<1x16xf32> to vector<16x16xf32>
    %121 = arith.select %117, %120, %118 : vector<16x16xi1>, vector<16x16xf32>
    %cst_79 = arith.constant 3.000000e+00 : f32
    %122 = vector.broadcast %cst_79 : f32 to vector<16x16xf32>
    %123 = arith.mulf %122, %115 : vector<16x16xf32>
    %cst_80 = arith.constant 1.000000e+01 : f32
    %124 = vector.broadcast %cst_80 : f32 to vector<16x16xf32>
    %125 = arith.mulf %124, %22 : vector<16x16xf32>
    %126 = arith.addf %123, %125 : vector<16x16xf32>
    %cst_81 = arith.constant 3.000000e+00 : f32
    %127 = vector.broadcast %cst_81 : f32 to vector<16x16xf32>
    %128 = arith.mulf %127, %121 : vector<16x16xf32>
    %129 = arith.addf %126, %128 : vector<16x16xf32>
    %130 = math.absf %129 : vector<16x16xf32>
    %c0_i32_82 = arith.constant 0 : i32
    %131 = vector.broadcast %c0_i32_82 : i32 to vector<16x16xi32>
    %132 = arith.cmpi eq, %109, %131 : vector<16x16xi32>
    %c1_i32_83 = arith.constant 1 : i32
    %133 = tpu.dynamic_rotate %30 by %c1_i32_83 dim 0 : vector<16x16xf32>, i32 -> vector<16x16xf32>
    %134 = vector.shape_cast %100 : vector<1x16xf32> to vector<1x16xf32>
    %135 = vector.broadcast %134 : vector<1x16xf32> to vector<16x16xf32>
    %136 = arith.select %132, %135, %133 : vector<16x16xi1>, vector<16x16xf32>
    %c15_i32_84 = arith.constant 15 : i32
    %137 = vector.broadcast %c15_i32_84 : i32 to vector<16x16xi32>
    %138 = arith.cmpi eq, %109, %137 : vector<16x16xi32>
    %c15_i32_85 = arith.constant 15 : i32
    %139 = tpu.dynamic_rotate %30 by %c15_i32_85 dim 0 : vector<16x16xf32>, i32 -> vector<16x16xf32>
    %140 = vector.shape_cast %108 : vector<1x16xf32> to vector<1x16xf32>
    %141 = vector.broadcast %140 : vector<1x16xf32> to vector<16x16xf32>
    %142 = arith.select %138, %141, %139 : vector<16x16xi1>, vector<16x16xf32>
    %143 = arith.subf %142, %136 : vector<16x16xf32>
    %144 = math.absf %143 : vector<16x16xf32>
    %145 = arith.addf %130, %144 : vector<16x16xf32>
    %146 = math.tanh %145 : vector<16x16xf32>
    %c0_86 = arith.constant 0 : index
    %c0_87 = arith.constant 0 : index
    %c0_88 = arith.constant 0 : index
    %c0_89 = arith.constant 0 : index
    %147 = vector.load %arg5[%c0_86, %c0_87, %c0_88, %c0_89] : memref<1x1x16x16xf32, #tpu.memory_space<vmem>>, vector<1x1x16x16xf32>
    %148 = vector.shape_cast %147 : vector<1x1x16x16xf32> to vector<16x16xf32>
    %149 = vector.shape_cast %146 : vector<16x16xf32> to vector<1x1x16x16xf32>
    tpu.vector_store %arg5[%c0_86, %c0_87, %c0_88, %c0_89], %149 {strides = array<i32>} : memref<1x1x16x16xf32, #tpu.memory_space<vmem>>, vector<1x1x16x16xf32>,
    return
  }
  func.func @transform_0(%arg0: i32, %arg1: i32) -> (i32, i32, i32, i32) {
    %c0_i32 = arith.constant 0 : i32
    %c0_i32_0 = arith.constant 0 : i32
    %c0_i32_1 = arith.constant 0 : i32
    return %arg0, %c0_i32, %arg1, %c0_i32_0 : i32, i32, i32, i32
  }
  func.func @transform_1(%arg0: i32, %arg1: i32) -> (i32, i32, i32, i32) {
    %c2_i32 = arith.constant 2 : i32
    %0 = arith.muli %arg1, %c2_i32 : i32
    %c1_i32 = arith.constant 1 : i32
    %1 = arith.subi %0, %c1_i32 : i32
    %c0_i32 = arith.constant 0 : i32
    %2 = arith.maxsi %1, %c0_i32 : i32
    %c0_i32_0 = arith.constant 0 : i32
    %c0_i32_1 = arith.constant 0 : i32
    %c0_i32_2 = arith.constant 0 : i32
    return %arg0, %c0_i32_0, %2, %c0_i32_1 : i32, i32, i32, i32
  }
  func.func @transform_2(%arg0: i32, %arg1: i32) -> (i32, i32, i32, i32) {
    %c1_i32 = arith.constant 1 : i32
    %0 = arith.addi %arg1, %c1_i32 : i32
    %c2_i32 = arith.constant 2 : i32
    %1 = arith.muli %0, %c2_i32 : i32
    %c1_i32_0 = arith.constant 1 : i32
    %2 = arith.minsi %1, %c1_i32_0 : i32
    %c0_i32 = arith.constant 0 : i32
    %c0_i32_1 = arith.constant 0 : i32
    %c0_i32_2 = arith.constant 0 : i32
    return %arg0, %c0_i32, %2, %c0_i32_1 : i32, i32, i32, i32
  }
  func.func @transform_3(%arg0: i32, %arg1: i32) -> (i32, i32, i32, i32) {
    %c0_i32 = arith.constant 0 : i32
    %c0_i32_0 = arith.constant 0 : i32
    %c0_i32_1 = arith.constant 0 : i32
    return %arg0, %c0_i32, %arg1, %c0_i32_0 : i32, i32, i32, i32
  }
}

</mosaic_0001>

<llo_original>
// kernel: tpu_custom_call.1
$region0: #{tpu_custom_call.1}
  #allocation0 [shape = 'u32[]', space=smem, size = 0x4, offset = 0x4, fixed_abs, tag = 'smem constant byte address 0x4 - core index']
  #allocation1 [shape = 'u32[144,128]{1,0:T(1,128)}', space=vmem, size = 0x12000, scoped, tag = 'internal scratch']
  %s0 = inlined_call_operand.hbm [shape: f32[2,4,16,16], index: 0, kind: input, shape index: {}]
  %s1 = inlined_call_operand.hbm [shape: f32[2,4,16,16], index: 1, kind: input, shape index: {}]
  %s2 = inlined_call_operand.hbm [shape: f32[2,4,16,16], index: 2, kind: input, shape index: {}]
  %s3 = inlined_call_operand.hbm [shape: f32[2,1,16,16], index: 3, kind: output, shape index: {}]
  %s4 = sld [smem:[#allocation0]]
  $region57: #{tpu_custom_call.1} parent=0
    _
  %s6 = ssub.s32 1, %s4
  %s7 = scalar_select 0, %s6, %s4
  $region1: #{tpu_custom_call.1} parent=0
    #allocation2 [shape = 'u8[65536]{0}', space=vmem, size = 0x10000, scoped, tag = 'input window, operand 0']
    #allocation3 [shape = 's32[2]{0}', space=sflag, size = 0x8, scoped, tag = 'scoped memory for tpu_custom_call.1']
    #allocation4 [shape = 's32[2]{0}', space=sflag, size = 0x8, scoped, tag = 'scoped memory for tpu_custom_call.1']
    #allocation5 [shape = 'u8[32768]{0}', space=vmem, size = 0x8000, scoped, tag = 'input window, operand 1']
    #allocation6 [shape = 's32[2]{0}', space=sflag, size = 0x8, scoped, tag = 'scoped memory for tpu_custom_call.1']
    #allocation7 [shape = 'u8[32768]{0}', space=vmem, size = 0x8000, scoped, tag = 'input window, operand 2']
    #allocation8 [shape = 'u8[16384]{0}', space=vmem, size = 0x4000, scoped, tag = 'output window, operand 0']
    %8 = vsyncpa [#allocation3], 0
    %s9 = scalar_lea.sflag [#allocation3], 1
    %10 = vsyncpa %s9, 0
    %11 = vsyncpa [#allocation6], 0
    %s12 = scalar_lea.sflag [#allocation6], 1
    %13 = vsyncpa %s12, 0
    %14 = vsyncpa [#allocation4], 0
    %s15 = scalar_lea.sflag [#allocation4], 1
    %16 = vsyncpa %s15, 0
    loop: start=0, step=1, limit=4
    $region2: #{tpu_custom_call.1} parent=1 // loop_pre_header
      _
    $region3: #{tpu_custom_call.1} parent=1 // loop_header
      %s18 = sphi 0, %s22
      %p19 = scmp.ge.s32.totalorder %s18, 4
      %s25 = sphi 0, %s37
      %s26 = sphi 0, %s33
      %s27 = sphi 0, %s25
      %s28 = sphi 0, %s26
      %s29 = sphi 0, %s27
      %s30 = sphi 0, %s28
      %s42 = sphi 0, %s44
      %s45 = sphi 0, %s42
      %s46 = sphi 0, %s45
      %s62 = sphi 0, %s46
      %s78 = sphi 0, %s80
      %s81 = sphi 0, %s78
      %s82 = sphi 0, %s81
      %s98 = sphi 0, %s82
      %s114 = sphi 0, %s116
      %s117 = sphi 0, %s114
      %s118 = sphi 0, %s117
      %s134 = sphi 0, %s118
      %s142 = sphi 0, %s144
      %s145 = sphi 0, %s142
      %s146 = sphi 0, %s145
      %s162 = sphi 0, %s146
    $region4: #{tpu_custom_call.1} parent=1 // loop_header_branch
      %21 = sbr.rel (%p19) target = $region8
    $region5: #{tpu_custom_call.1} parent=1 // loop_body
      %s23 = ssub.s32 %s18, 1
      %s24 = ssub.s32 %s18, 2
      %s31 = sadd.s32 1, %s26
      %p32 = scmp.ge.s32.totalorder %s31, 1
      %s33 = scalar_select %p32, 0, %s31
      %s34 = sadd.s32 1, %s25
      %s35 = scalar_select %p32, %s34, %s25
      %p36 = scmp.ge.s32.totalorder %s35, 2
      %s37 = scalar_select %p36, 0, %s35
      %s38 = ssub.s32 %s25, %s37
      %s39 = ssub.s32 %s26, %s33
      %s40 = sor.u32 %s38, %s39
      %p41 = scmp.eq.s32.totalorder %s40, 0
      %s43 = sadd.s32 %s42, 1
      %s44 = scalar_select %p41, %s42, %s43
      %p47 = pneg %p41
      %p48 = scmp.eq.s32.totalorder %s18, 1
      %p49 = por %p47, %p48
      %p50 = scmp.ne.s32.totalorder %s42, %s45
      %p51 = scmp.eq.s32.totalorder %s18, 0
      %p52 = por %p50, %p51
      %p53 = scmp.ne.s32.totalorder %s42, %s45
      %p54 = scmp.eq.s32.totalorder %s23, 1
      %p55 = por %p53, %p54
      %p56 = scmp.ne.s32.totalorder %s45, %s46
      %p57 = scmp.eq.s32.totalorder %s23, 0
      %p58 = por %p56, %p57
      %p59 = scmp.ne.s32.totalorder %s45, %s46
      %p60 = scmp.eq.s32.totalorder %s24, 1
      %p61 = por %p59, %p60
      %p63 = scmp.ne.s32.totalorder %s46, %s62
      %p64 = scmp.eq.s32.totalorder %s24, 0
      %p65 = por %p63, %p64
      %s66 = smul.u32 %s26, 2
      %s67 = ssub.s32 %s66, 1
      %p68 = scmp.gt.s32.totalorder %s67, 0
      %s69 = scalar_select %p68, %s67, 0
      %s70 = smul.u32 %s33, 2
      %s71 = ssub.s32 %s70, 1
      %p72 = scmp.gt.s32.totalorder %s71, 0
      %s73 = scalar_select %p72, %s71, 0
      %s74 = ssub.s32 %s25, %s37
      %s75 = ssub.s32 %s69, %s73
      %s76 = sor.u32 %s74, %s75
      %p77 = scmp.eq.s32.totalorder %s76, 0
      %s79 = sadd.s32 %s78, 1
      %s80 = scalar_select %p77, %s78, %s79
      %p83 = pneg %p77
      %p84 = scmp.eq.s32.totalorder %s18, 1
      %p85 = por %p83, %p84
      %p86 = scmp.ne.s32.totalorder %s78, %s81
      %p87 = scmp.eq.s32.totalorder %s18, 0
      %p88 = por %p86, %p87
      %p89 = scmp.ne.s32.totalorder %s78, %s81
      %p90 = scmp.eq.s32.totalorder %s23, 1
      %p91 = por %p89, %p90
      %p92 = scmp.ne.s32.totalorder %s81, %s82
      %p93 = scmp.eq.s32.totalorder %s23, 0
      %p94 = por %p92, %p93
      %p95 = scmp.ne.s32.totalorder %s81, %s82
      %p96 = scmp.eq.s32.totalorder %s24, 1
      %p97 = por %p95, %p96
      %p99 = scmp.ne.s32.totalorder %s82, %s98
      %p100 = scmp.eq.s32.totalorder %s24, 0
      %p101 = por %p99, %p100
      %s102 = sadd.s32 %s26, 1
      %s103 = smul.u32 %s102, 2
      %p104 = scmp.lt.s32.totalorder %s103, 1
      %s105 = scalar_select %p104, %s103, 1
      %s106 = sadd.s32 %s33, 1
      %s107 = smul.u32 %s106, 2
      %p108 = scmp.lt.s32.totalorder %s107, 1
      %s109 = scalar_select %p108, %s107, 1
      %s110 = ssub.s32 %s25, %s37
      %s111 = ssub.s32 %s105, %s109
      %s112 = sor.u32 %s110, %s111
      %p113 = scmp.eq.s32.totalorder %s112, 0
      %s115 = sadd.s32 %s114, 1
      %s116 = scalar_select %p113, %s114, %s115
      %p119 = pneg %p113
      %p120 = scmp.eq.s32.totalorder %s18, 1
      %p121 = por %p119, %p120
      %p122 = scmp.ne.s32.totalorder %s114, %s117
      %p123 = scmp.eq.s32.totalorder %s18, 0
      %p124 = por %p122, %p123
      %p125 = scmp.ne.s32.totalorder %s114, %s117
      %p126 = scmp.eq.s32.totalorder %s23, 1
      %p127 = por %p125, %p126
      %p128 = scmp.ne.s32.totalorder %s117, %s118
      %p129 = scmp.eq.s32.totalorder %s23, 0
      %p130 = por %p128, %p129
      %p131 = scmp.ne.s32.totalorder %s117, %s118
      %p132 = scmp.eq.s32.totalorder %s24, 1
      %p133 = por %p131, %p132
      %p135 = scmp.ne.s32.totalorder %s118, %s134
      %p136 = scmp.eq.s32.totalorder %s24, 0
      %p137 = por %p135, %p136
      %s138 = ssub.s32 %s25, %s37
      %s139 = ssub.s32 %s26, %s33
      %s140 = sor.u32 %s138, %s139
      %p141 = scmp.eq.s32.totalorder %s140, 0
      %s143 = sadd.s32 %s142, 1
      %s144 = scalar_select %p141, %s142, %s143
      %p147 = pneg %p141
      %p148 = scmp.eq.s32.totalorder %s18, 1
      %p149 = por %p147, %p148
      %p150 = scmp.ne.s32.totalorder %s142, %s145
      %p151 = scmp.eq.s32.totalorder %s18, 0
      %p152 = por %p150, %p151
      %p153 = scmp.ne.s32.totalorder %s142, %s145
      %p154 = scmp.eq.s32.totalorder %s23, 1
      %p155 = por %p153, %p154
      %p156 = scmp.ne.s32.totalorder %s145, %s146
      %p157 = scmp.eq.s32.totalorder %s23, 0
      %p158 = por %p156, %p157
      %p159 = scmp.ne.s32.totalorder %s145, %s146
      %p160 = scmp.eq.s32.totalorder %s24, 1
      %p161 = por %p159, %p160
      %p163 = scmp.ne.s32.totalorder %s146, %s162
      %p164 = scmp.eq.s32.totalorder %s24, 0
      %p165 = por %p163, %p164
      %p166 = scmp.le.s32.totalorder 1, %s18
      %p167 = scmp.lt.s32.totalorder %s18, 3
      %p168 = pnand %p166, %p167
      %p169 = pneg %p168
      // Predicated region
      $region9: #{tpu_custom_call.1} parent=5 // pred_check
        _
      $region10: #{tpu_custom_call.1} parent=5 // pred_check_branch
        %171 = sbr.rel (%p168) target = $region12
      $region11: #{tpu_custom_call.1} parent=5 // pred_region
        %s172 = ssub.s32 %s18, 1
      $region12: #{tpu_custom_call.1} parent=5 // pred_fallthru
        _
      %p173 = scmp.lt.s32.totalorder %s18, 2
      // Predicated region
      $region13: #{tpu_custom_call.1} parent=5 // pred_check
        %p174 = pneg %p173
      $region14: #{tpu_custom_call.1} parent=5 // pred_check_branch
        %176 = sbr.rel (%p174) target = $region16
      $region15: #{tpu_custom_call.1} parent=5 // pred_region
        // Predicated region
        $region17: #{tpu_custom_call.1} parent=15 // pred_check
          %p177 = pneg %p52
        $region18: #{tpu_custom_call.1} parent=15 // pred_check_branch
          %179 = sbr.rel (%p177) target = $region20
        $region19: #{tpu_custom_call.1} parent=15 // pred_region
          %s180 = sand.u32 %s42, 1
          %s181 = scalar_lea.sflag [#allocation3], %s180
          %s182 = sand.u32 %s42, 1
          %s183 = smul.addr %s182, 64
          %s184 = scalar_lea.vmem [#allocation2], %s183
          %s185 = smul.u32 2, %s26
          %s187 = ssub.s32 1024, 1024
          %188 = vsyncadd %s181, %s187
          %s189 = smul.addr %s25, 8
          %s190 = sadd.s32 %s185, %s189
          %s191 = smul.addr %s190, 128
          %s192 = scalar_lea.hbm %s0, %s191
          %s193 = sshll.u32 %s184, 4
          %s194 = int_to_ptr.vmem [resolvable:$true] %s193
          %199 = dma.hbm_to_vmem [thread:$0]  %s192, 1024, %s194, %s181, 128, 128, 8
        $region20: #{tpu_custom_call.1} parent=15 // pred_fallthru
          _
        // Predicated region
        $region21: #{tpu_custom_call.1} parent=15 // pred_check
          %p200 = pneg %p88
        $region22: #{tpu_custom_call.1} parent=15 // pred_check_branch
          %202 = sbr.rel (%p200) target = $region24
        $region23: #{tpu_custom_call.1} parent=15 // pred_region
          %s203 = sand.u32 %s18, 1
          %s204 = scalar_lea.sflag [#allocation6], %s203
          %s205 = sand.u32 %s78, 1
          %s206 = smul.addr %s205, 32
          %s207 = scalar_lea.vmem [#allocation5], %s206
          %s208 = smul.u32 %s26, 2
          %s209 = ssub.s32 %s208, 1
          %p210 = scmp.gt.s32.totalorder %s209, 0
          %s211 = scalar_select %p210, %s209, 0
          %s213 = ssub.s32 512, 512
          %214 = vsyncadd %s204, %s213
          %s215 = smul.addr %s25, 8
          %s216 = sadd.s32 %s211, %s215
          %s217 = smul.addr %s216, 128
          %s218 = scalar_lea.hbm %s1, %s217
          %s219 = sshll.u32 %s207, 4
          %s220 = int_to_ptr.vmem [resolvable:$true] %s219
          %225 = dma.hbm_to_vmem [thread:$0]  %s218, 512, %s220, %s204, 256, 128, 8
        $region24: #{tpu_custom_call.1} parent=15 // pred_fallthru
          _
        // Predicated region
        $region25: #{tpu_custom_call.1} parent=15 // pred_check
          %p226 = pneg %p124
        $region26: #{tpu_custom_call.1} parent=15 // pred_check_branch
          %228 = sbr.rel (%p226) target = $region28
        $region27: #{tpu_custom_call.1} parent=15 // pred_region
          %s229 = sand.u32 %s18, 1
          %s230 = scalar_lea.sflag [#allocation6], %s229
          %s231 = sand.u32 %s114, 1
          %s232 = smul.addr %s231, 32
          %s233 = scalar_lea.vmem [#allocation7], %s232
          %s234 = sadd.s32 %s26, 1
          %s235 = smul.u32 %s234, 2
          %p236 = scmp.lt.s32.totalorder %s235, 1
          %s237 = scalar_select %p236, %s235, 1
          %s239 = ssub.s32 512, 512
          %240 = vsyncadd %s230, %s239
          %s241 = smul.addr %s25, 8
          %s242 = sadd.s32 %s237, %s241
          %s243 = smul.addr %s242, 128
          %s244 = scalar_lea.hbm %s2, %s243
          %s245 = sshll.u32 %s233, 4
          %s246 = int_to_ptr.vmem [resolvable:$true] %s245
          %251 = dma.hbm_to_vmem [thread:$0]  %s244, 512, %s246, %s230, 256, 128, 8
        $region28: #{tpu_custom_call.1} parent=15 // pred_fallthru
          _
      $region16: #{tpu_custom_call.1} parent=5 // pred_fallthru
        _
      %p252 = scmp.le.s32.totalorder 1, %s18
      %p253 = scmp.lt.s32.totalorder %s18, 3
      %p254 = pnand %p252, %p253
      %p255 = pneg %p254
      // Predicated region
      $region29: #{tpu_custom_call.1} parent=5 // pred_check
        _
      $region30: #{tpu_custom_call.1} parent=5 // pred_check_branch
        %257 = sbr.rel (%p254) target = $region32
      $region31: #{tpu_custom_call.1} parent=5 // pred_region
        %s258 = ssub.s32 %s18, 1
        %s259 = sand.u32 %s45, 1
        %s260 = scalar_lea.sflag [#allocation3], %s259
        %s261 = sand.u32 %s45, 1
        %s262 = smul.addr %s261, 64
        %s263 = scalar_lea.vmem [#allocation2], %s262
        // Predicated region
        $region33: #{tpu_custom_call.1} parent=31 // pred_check
          %p264 = pneg %p58
        $region34: #{tpu_custom_call.1} parent=31 // pred_check_branch
          %266 = sbr.rel (%p264) target = $region36
        $region35: #{tpu_custom_call.1} parent=31 // pred_region
          %267 = dma.done %s260, 1024
        $region36: #{tpu_custom_call.1} parent=31 // pred_fallthru
          _
        %s268 = sand.u32 %s23, 1
        %s269 = scalar_lea.sflag [#allocation6], %s268
        %s270 = sand.u32 %s81, 1
        %s271 = smul.addr %s270, 32
        %s272 = scalar_lea.vmem [#allocation5], %s271
        // Predicated region
        $region37: #{tpu_custom_call.1} parent=31 // pred_check
          %p273 = pneg %p94
        $region38: #{tpu_custom_call.1} parent=31 // pred_check_branch
          %275 = sbr.rel (%p273) target = $region40
        $region39: #{tpu_custom_call.1} parent=31 // pred_region
          %276 = dma.done %s269, 512
        $region40: #{tpu_custom_call.1} parent=31 // pred_fallthru
          _
        %s277 = sand.u32 %s23, 1
        %s278 = scalar_lea.sflag [#allocation6], %s277
        %s279 = sand.u32 %s117, 1
        %s280 = smul.addr %s279, 32
        %s281 = scalar_lea.vmem [#allocation7], %s280
        // Predicated region
        $region41: #{tpu_custom_call.1} parent=31 // pred_check
          %p282 = pneg %p130
        $region42: #{tpu_custom_call.1} parent=31 // pred_check_branch
          %284 = sbr.rel (%p282) target = $region44
        $region43: #{tpu_custom_call.1} parent=31 // pred_region
          %285 = dma.done %s278, 512
        $region44: #{tpu_custom_call.1} parent=31 // pred_fallthru
          _
        %s286 = sand.u32 %s45, 1
        %s287 = scalar_lea.sflag [#allocation3], %s286
        %s288 = sand.u32 %s45, 1
        %s289 = smul.addr %s288, 64
        %s290 = scalar_lea.vmem [#allocation2], %s289
        %p291 = pneg %p58
        %p292 = pneg %p55
        %s293 = sand.u32 %s23, 1
        %s294 = scalar_lea.sflag [#allocation6], %s293
        %s295 = sand.u32 %s81, 1
        %s296 = smul.addr %s295, 32
        %s297 = scalar_lea.vmem [#allocation5], %s296
        %p298 = pneg %p94
        %p299 = pneg %p91
        %s300 = sand.u32 %s23, 1
        %s301 = scalar_lea.sflag [#allocation6], %s300
        %s302 = sand.u32 %s117, 1
        %s303 = smul.addr %s302, 32
        %s304 = scalar_lea.vmem [#allocation7], %s303
        %p305 = pneg %p130
        %p306 = pneg %p127
        %p307 = pneg %p158
        %p308 = pneg %p155
        %s309 = sand.u32 %s145, 1
        %s310 = scalar_lea.sflag [#allocation4], %s309
        %s311 = sand.u32 %s145, 1
        %s312 = smul.addr %s311, 16
        %s313 = scalar_lea.vmem [#allocation8], %s312
        %s314 = smul.u32 2, %s28
        %s315 = smul.u32 %s28, 2
        %s316 = ssub.s32 %s315, 1
        %p317 = scmp.gt.s32.totalorder %s316, 0
        %s318 = scalar_select %p317, %s316, 0
        %s319 = sadd.s32 %s28, 1
        %s320 = smul.u32 %s319, 2
        %p321 = scmp.lt.s32.totalorder %s320, 1
        %s322 = scalar_select %p321, %s320, 1
        %s323 = smul.u32 2, %s28
        %v324 = vld [vmem:[%s263] sm:$0xff]
        %v325 = vld [vmem:[%s263 + $0x8] sm:$0xff]
        %s326 = scalar_lea.vmem %s263, 16 [#allocation2]
        %v327 = vld [vmem:[%s326] sm:$0xff]
        %v328 = vld [vmem:[%s326 + $0x8] sm:$0xff]
        %v329 = vadd.f32 %v324, %v327
        %v330 = vadd.f32 %v325, %v328
        %s331 = scalar_lea.vmem %s263, 32 [#allocation2]
        %v332 = vld [vmem:[%s331] sm:$0xff]
        %v333 = vld [vmem:[%s331 + $0x8] sm:$0xff]
        %v334 = vadd.f32 %v329, %v332
        %v335 = vadd.f32 %v330, %v333
        %s336 = scalar_lea.vmem %s263, 48 [#allocation2]
        %v337 = vld [vmem:[%s336] sm:$0xff]
        %v338 = vld [vmem:[%s336 + $0x8] sm:$0xff]
        %v339 = vadd.f32 %v334, %v337
        %v340 = vadd.f32 %v335, %v338
        %v341 = vlaneseq
        %v342 = vand.u32 %v341, 127
        %vm343 = vcmp.eq.s32.totalorder %v342, 0
        %vm344 = vcmask 1047680
        %345 = vrot.lane.b32.xlu0 %v339, 16
        %v346 = vpop.permute.xlu0 %345
        %v347 = vsel %vm344, %v346, %v339
        %348 = vrot.lane.b32.xlu0 %v340, 16
        %v349 = vpop.permute.xlu0 %348
        %v350 = vsel %vm344, %v349, %v340
        %351 = vrot.lane.b32.xlu0 %v347, 16
        %v352 = vpop.permute.xlu0 %351
        %353 = vrot.lane.b32.xlu0 %v350, 16
        %v354 = vpop.permute.xlu0 %353
        %v355 = vsel %vm344, %v352, %v339
        %v356 = vsel %vm344, %v354, %v340
        %359 = vrot.lane.b32.xlu0 %v355, 113
        %v360 = vpop.permute.xlu0 %359
        %361 = vrot.lane.b32.xlu0 %v356, 113
        %v362 = vpop.permute.xlu0 %361
        %v365 = vsel %vm343, 0.0, %v360
        %v366 = vsel %vm343, 0.0, %v362
        %vm367 = vcmp.eq.s32.totalorder %v342, 15
        %368 = vrot.lane.b32.xlu0 %v355, 127
        %v369 = vpop.permute.xlu0 %368
        %370 = vrot.lane.b32.xlu0 %v356, 127
        %v371 = vpop.permute.xlu0 %370
        %v374 = vsel %vm367, 0.0, %v369
        %v375 = vsel %vm367, 0.0, %v371
        %v376 = vsub.f32 %v374, %v365
        %v377 = vsub.f32 %v375, %v366
        %v378 = vmul.f32 %v365, 3.0
        %v379 = vmul.f32 %v366, 3.0
        %v380 = vmul.f32 %v339, 10.0
        %v381 = vmul.f32 %v340, 10.0
        %v382 = vadd.f32 %v378, %v380
        %v383 = vadd.f32 %v379, %v381
        %v384 = vmul.f32 %v374, 3.0
        %v385 = vmul.f32 %v375, 3.0
        %v386 = vadd.f32 %v382, %v384
        %v387 = vadd.f32 %v383, %v385
        %v388 = vld [vmem:[%s272] sm:$0xff]
        %s389 = scalar_lea.vmem %s272, 8 [#allocation5]
        %v390 = vld [vmem:[%s389] sm:$0xff]
        %v391 = vadd.f32 %v388, %v390
        %s392 = scalar_lea.vmem %s272, 16 [#allocation5]
        %v393 = vld [vmem:[%s392] sm:$0xff]
        %v394 = vadd.f32 %v391, %v393
        %s395 = scalar_lea.vmem %s272, 24 [#allocation5]
        %v396 = vld [vmem:[%s395] sm:$0xff]
        %v397 = vadd.f32 %v394, %v396
        %398 = vrot.lane.b32.xlu0 %v397, 16
        %v399 = vpop.permute.xlu0 %398
        %v400 = vsel %vm344, %v399, %v397
        %401 = vrot.lane.b32.xlu0 %v400, 16
        %v402 = vpop.permute.xlu0 %401
        %v403 = vsel %vm344, %v402, %v397
        %405 = vrot.lane.b32.xlu0 %v403, 113
        %v406 = vpop.permute.xlu0 %405
        %v408 = vsel %vm343, 0.0, %v406
        %409 = vrot.lane.b32.xlu0 %v403, 127
        %v410 = vpop.permute.xlu0 %409
        %v412 = vsel %vm367, 0.0, %v410
        %v413 = vsub.f32 %v412, %v408
        %v414 = vmul.f32 %v408, 3.0
        %v415 = vmul.f32 %v397, 10.0
        %v416 = vadd.f32 %v414, %v415
        %v417 = vmul.f32 %v412, 3.0
        %v418 = vadd.f32 %v416, %v417
        %v419 = vld [vmem:[%s281] sm:$0xff]
        %s420 = scalar_lea.vmem %s281, 8 [#allocation7]
        %v421 = vld [vmem:[%s420] sm:$0xff]
        %v422 = vadd.f32 %v419, %v421
        %s423 = scalar_lea.vmem %s281, 16 [#allocation7]
        %v424 = vld [vmem:[%s423] sm:$0xff]
        %v425 = vadd.f32 %v422, %v424
        %s426 = scalar_lea.vmem %s281, 24 [#allocation7]
        %v427 = vld [vmem:[%s426] sm:$0xff]
        %v428 = vadd.f32 %v425, %v427
        %429 = vrot.lane.b32.xlu0 %v428, 16
        %v430 = vpop.permute.xlu0 %429
        %v431 = vsel %vm344, %v430, %v428
        %432 = vrot.lane.b32.xlu0 %v431, 16
        %v433 = vpop.permute.xlu0 %432
        %v434 = vsel %vm344, %v433, %v428
        %436 = vrot.lane.b32.xlu0 %v434, 113
        %v437 = vpop.permute.xlu0 %436
        %v439 = vsel %vm343, 0.0, %v437
        %440 = vrot.lane.b32.xlu0 %v434, 127
        %v441 = vpop.permute.xlu0 %440
        %v443 = vsel %vm367, 0.0, %v441
        %v444 = vsub.f32 %v443, %v439
        %v445 = vmul.f32 %v439, 3.0
        %v446 = vmul.f32 %v428, 10.0
        %v447 = vadd.f32 %v445, %v446
        %v448 = vmul.f32 %v443, 3.0
        %v449 = vadd.f32 %v447, %v448
        %p450 = scmp.eq.s32.totalorder %s28, 0
        %s451 = scalar_select %p450, 1, 0
        %v452 = vstv %s451
        %vm453 = vcmp.eq.s32.totalorder %v452, 1
        %v454 = vsel %vm453, 0.0, %v413
        %v455 = vsel %vm453, 0.0, %v418
        %v456 = vsel %vm453, 0.0, %v444
        %v457 = vsel %vm453, 0.0, %v449
        %v458 = vlaneseq
        %v459 = vshrl.u32 %v458, 7
        %v460 = vadd.s32 %v459, 8
        %vm461 = vcmp.eq.s32.totalorder %v459, 0
        %vm462 = vcmp.eq.s32.totalorder %v460, 0
        %v463 = vrot.slane %v376, 7
        %v464 = vrot.slane %v377, 7
        %vm465 = vcmp.lt.s32.totalorder %v459, 1
        %v466 = vsel %vm465, %v463, %v464
        %v467 = vsel %vm465, %v464, %v463
        %v468 = vlaneseq
        %v469 = vshrl.u32 %v468, 7
        %v470 = vsub.s32 7, %v469
        %v471 = vrot.slane %v454, %v470
        %v472 = vsel %vm461, %v471, %v467
        %v473 = vsel %vm462, %v471, %v466
        %vm474 = vcmp.eq.s32.totalorder %v459, 15
        %vm475 = vcmp.eq.s32.totalorder %v460, 15
        %v476 = vrot.slane %v376, 1
        %v477 = vrot.slane %v377, 1
        %vm478 = vcmp.lt.s32.totalorder %v459, 7
        %v479 = vsel %vm478, %v476, %v477
        %v480 = vsel %vm478, %v477, %v476
        %v481 = vlaneseq
        %v482 = vshrl.u32 %v481, 7
        %v483 = vsub.s32 0, %v482
        %v484 = vrot.slane %v456, %v483
        %v485 = vsel %vm474, %v484, %v479
        %v486 = vsel %vm475, %v484, %v480
        %v487 = vmul.f32 %v472, 3.0
        %v488 = vmul.f32 %v473, 3.0
        %v489 = vmul.f32 %v376, 10.0
        %v490 = vmul.f32 %v377, 10.0
        %v491 = vadd.f32 %v487, %v489
        %v492 = vadd.f32 %v488, %v490
        %v493 = vmul.f32 %v485, 3.0
        %v494 = vmul.f32 %v486, 3.0
        %v495 = vadd.f32 %v491, %v493
        %v496 = vadd.f32 %v492, %v494
        %v497 = vand.u32 2147483647, %v495
        %v498 = vand.u32 2147483647, %v496
        %v499 = vrot.slane %v386, 7
        %v500 = vrot.slane %v387, 7
        %v501 = vsel %vm465, %v499, %v500
        %v502 = vsel %vm465, %v500, %v499
        %v503 = vlaneseq
        %v504 = vshrl.u32 %v503, 7
        %v505 = vsub.s32 7, %v504
        %v506 = vrot.slane %v455, %v505
        %v507 = vsel %vm461, %v506, %v502
        %v508 = vsel %vm462, %v506, %v501
        %v509 = vrot.slane %v386, 1
        %v510 = vrot.slane %v387, 1
        %v511 = vsel %vm478, %v509, %v510
        %v512 = vsel %vm478, %v510, %v509
        %v513 = vlaneseq
        %v514 = vshrl.u32 %v513, 7
        %v515 = vsub.s32 0, %v514
        %v516 = vrot.slane %v457, %v515
        %v517 = vsel %vm474, %v516, %v511
        %v518 = vsel %vm475, %v516, %v512
        %v519 = vsub.f32 %v517, %v507
        %v520 = vsub.f32 %v518, %v508
        %v521 = vand.u32 2147483647, %v519
        %v522 = vand.u32 2147483647, %v520
        %v523 = vadd.f32 %v497, %v521
        %v524 = vadd.f32 %v498, %v522
        %v525 = vtanh.pop %v523
        %v526 = vtanh.pop %v524
        %vm527 = vcmask 130048
        %528 = vst.msk [vmem:[%s313] sm:$0xff] %vm527, %v525
        %529 = vst.msk [vmem:[%s313 + $0x8] sm:$0xff] %vm527, %v526
        %s530 = sand.u32 %s145, 1
        %s531 = scalar_lea.sflag [#allocation4], %s530
        %s532 = sand.u32 %s145, 1
        %s533 = smul.addr %s532, 16
        %s534 = scalar_lea.vmem [#allocation8], %s533
        // Predicated region
        $region45: #{tpu_custom_call.1} parent=31 // pred_check
          %p535 = pneg %p155
        $region46: #{tpu_custom_call.1} parent=31 // pred_check_branch
          %537 = sbr.rel (%p535) target = $region48
        $region47: #{tpu_custom_call.1} parent=31 // pred_region
          %s538 = smul.u32 2, %s28
          %s540 = ssub.s32 256, 256
          %541 = vsyncadd %s531, %s540
          %s542 = smul.addr %s27, 2
          %s543 = sadd.s32 %s538, %s542
          %s544 = smul.addr %s543, 128
          %s545 = scalar_lea.hbm %s3, %s544
          %s546 = sshll.u32 %s534, 4
          %s547 = int_to_ptr.vmem [resolvable:$true] %s546
          %552 = dma.vmem_to_hbm [thread:$0]  %s547, 256, %s545, %s531, 128, 128, 8
        $region48: #{tpu_custom_call.1} parent=31 // pred_fallthru
          _
      $region32: #{tpu_custom_call.1} parent=5 // pred_fallthru
        _
      %p553 = scmp.le.s32.totalorder 2, %s18
      // Predicated region
      $region49: #{tpu_custom_call.1} parent=5 // pred_check
        %p554 = pneg %p553
      $region50: #{tpu_custom_call.1} parent=5 // pred_check_branch
        %556 = sbr.rel (%p554) target = $region52
      $region51: #{tpu_custom_call.1} parent=5 // pred_region
        %s557 = ssub.s32 %s18, 2
        // Predicated region
        $region53: #{tpu_custom_call.1} parent=51 // pred_check
          %p558 = pneg %p161
        $region54: #{tpu_custom_call.1} parent=51 // pred_check_branch
          %560 = sbr.rel (%p558) target = $region56
        $region55: #{tpu_custom_call.1} parent=51 // pred_region
          %s561 = sand.u32 %s146, 1
          %s562 = scalar_lea.sflag [#allocation4], %s561
          %s563 = sand.u32 %s146, 1
          %s564 = smul.addr %s563, 16
          %s565 = scalar_lea.vmem [#allocation8], %s564
          %566 = dma.done %s562, 256
        $region56: #{tpu_custom_call.1} parent=51 // pred_fallthru
          _
      $region52: #{tpu_custom_call.1} parent=5 // pred_fallthru
        _
    $region6: #{tpu_custom_call.1} parent=1 // loop_footer
      %s22 = sadd.s32 1, %s18
    $region7: #{tpu_custom_call.1} parent=1 // loop_footer_branch
      %17 = sbr.rel target = $region3
    $region8: #{tpu_custom_call.1} parent=1 // loop_exit
      _
    %567 = vsyncpa [#allocation3], 1
    %s568 = scalar_lea.sflag [#allocation3], 1
    %569 = vsyncpa %s568, 1
    %570 = vsyncpa [#allocation6], 1
    %s571 = scalar_lea.sflag [#allocation6], 1
    %572 = vsyncpa %s571, 1
    %573 = vsyncpa [#allocation4], 1
    %s574 = scalar_lea.sflag [#allocation4], 1
    %575 = vsyncpa %s574, 1

</llo_original>
